<compile_context>
chip_gen: v5e
topology: v5e:2x2
jax: 0.10.0
libtpu: 0.0.40
codegen_flags: <defaults>
</compile_context>

<pallas_src>
import functools

import jax
import jax.numpy as jnp
from jax import lax
from jax.experimental import pallas as pl
from jax.experimental.pallas import tpu as pltpu


def _triple(v):
    if isinstance(v, (tuple, list)):
        assert len(v) == 3
        return tuple(int(x) for x in v)
    return (int(v),) * 3


def _round_up(v, m):
    return (v + m - 1) // m * m


def conv_bn_relu_kernel(x_ref, w_ref, bias_ref, o_ref, stage_ref, *,
                        kd_sz, kh_sz, kw_sz, sd, dd, dh, dw, wp, cin_pad,
                        l_out):
    """Computes one fused Conv3d(+folded BN)+ReLU output depth-plane.

    x_ref:     (1, Dp, Cin_pad, Lx)   bf16, whole padded sample (resident per n)
    w_ref:     (Cout, K_total)        bf16, BN scale folded in (resident)
    bias_ref:  (Cout, 1)              f32 folded BN bias (resident)
    o_ref:     (1, 1, Cout, L_out)    f32 output plane (lane-dense, 128-aligned)
    stage_ref: (K_total, L_out)       bf16 scratch holding all shifted taps
    """
    od = pl.program_id(1)
    d_base = od * sd

    # Stage every (kd, ih, iw) tap's shifted input slice so the whole conv for
    # this output plane reduces to a single matmul with contraction depth
    # K_total = Kd*Kh*Kw*Cin_pad (fills the MXU even when Cin is small).
    t = 0
    for kd in range(kd_sz):
        d_idx = d_base + kd * dd
        for ih in range(kh_sz):
            for iw in range(kw_sz):
                off = ih * dh * wp + iw * dw      # static lane shift
                stage_ref[t * cin_pad:(t + 1) * cin_pad, :] = (
                    x_ref[0, d_idx, :, pl.ds(off, l_out)])
                t += 1

    acc = jnp.dot(w_ref[...], stage_ref[...],
                  preferred_element_type=jnp.float32)      # (Cout, L_out) f32
    y = acc + bias_ref[...]
    o_ref[0, 0] = jnp.maximum(y, 0.0).astype(o_ref.dtype)


def basic_conv3d(x, w, gamma, beta, running_mean, running_var, *,
                 stride=1, padding=0, dilation=1, eps=1e-5):
    """x: (N, Cin, D, H, W); w: (Cout, Cin, Kd, Kh, Kw). Returns NCDHW f32."""
    n, cin, d, h, wdt = x.shape
    cout, cin_w, kd_sz, kh_sz, kw_sz = w.shape
    assert cin == cin_w
    sd, sh, sw = _triple(stride)
    pd, ph, pw = _triple(padding)
    dd, dh, dw = _triple(dilation)

    dp, hp, wp = d + 2 * pd, h + 2 * ph, wdt + 2 * pw
    do = (dp - (kd_sz - 1) * dd - 1) // sd + 1
    ho_d = hp - (kh_sz - 1) * dh                 # dense (stride-1) H output
    wo_d = wp - (kw_sz - 1) * dw                 # dense (stride-1) W output
    assert do >= 1 and ho_d >= 1 and wo_d >= 1

    # Lane-dense output plane: 128-aligned flattened dense HW length.
    l_out = _round_up(ho_d * wp, 128)
    max_off = (kh_sz - 1) * dh * wp + (kw_sz - 1) * dw
    extra = max(0, max_off + l_out - hp * wp)    # zeros that back the largest
    extra_rows = (extra + wp - 1) // wp          # tap shift + lane rounding
    hp2 = hp + extra_rows
    lx = hp2 * wp

    cin_pad = _round_up(cin, 16)                 # bf16 sublane packing

    # Single pad pass (channel pad + DHW halo + extra H rows), then flatten HW
    # and move Cin next to the lane axis: (N, Cin, D, H, W) -> (N, Dp, Cin, L).
    x_p = jnp.pad(x.astype(jnp.bfloat16),
                  ((0, 0), (0, cin_pad - cin), (pd, pd),
                   (ph, ph + extra_rows), (pw, pw)))
    x_flat = jnp.transpose(x_p.reshape(n, cin_pad, dp, lx), (0, 2, 1, 3))

    # Fold eval-mode BatchNorm: scale into the weights, bias as epilogue add.
    inv_std = 1.0 / jnp.sqrt(running_var.astype(jnp.float32) + eps)
    scale_v = gamma.astype(jnp.float32) * inv_std
    bias_v = (beta.astype(jnp.float32)
              - running_mean.astype(jnp.float32) * scale_v)

    n_taps = kd_sz * kh_sz * kw_sz
    k_total = n_taps * cin_pad
    # (Cout, Cin, Kd, Kh, Kw) -> (Cout, Kd, Kh, Kw, Cin_pad) -> (Cout, K_total)
    w_r = jnp.transpose(w.astype(jnp.float32), (0, 2, 3, 4, 1))
    w_r = w_r * scale_v[:, None, None, None, None]
    w_r = jnp.pad(w_r, ((0, 0),) * 4 + ((0, cin_pad - cin),))
    w_r = w_r.reshape(cout, k_total).astype(jnp.bfloat16)
    bias = bias_v.reshape(cout, 1)

    kernel = functools.partial(
        conv_bn_relu_kernel, kd_sz=kd_sz, kh_sz=kh_sz, kw_sz=kw_sz,
        sd=sd, dd=dd, dh=dh, dw=dw, wp=wp, cin_pad=cin_pad, l_out=l_out)

    out_flat = pl.pallas_call(
        kernel,
        out_shape=jax.ShapeDtypeStruct((n, do, cout, l_out), jnp.float32),
        grid_spec=pltpu.PrefetchScalarGridSpec(
            num_scalar_prefetch=0,
            grid=(n, do),
            in_specs=[
                # Whole padded sample: same block index for every od of a given
                # n, so it is DMA'd once per sample (no per-tap re-fetch).
                pl.BlockSpec((1, dp, cin_pad, lx),
                             lambda ni, od: (ni, 0, 0, 0)),
                # Weights / bias resident for the whole kernel.
                pl.BlockSpec((cout, k_total), lambda ni, od: (0, 0)),
                pl.BlockSpec((cout, 1), lambda ni, od: (0, 0)),
            ],
            out_specs=pl.BlockSpec((1, 1, cout, l_out),
                                   lambda ni, od: (ni, od, 0, 0)),
            scratch_shapes=[pltpu.VMEM((k_total, l_out), jnp.bfloat16)],
        ),
        compiler_params=pltpu.CompilerParams(
            dimension_semantics=("parallel", "parallel"),
            vmem_limit_bytes=48 * 1024 * 1024),
    )(x_flat, w_r, bias)

    # Crop lane padding / junk columns, apply H/W stride, back to NCDHW.
    out = out_flat[..., :ho_d * wp].reshape(n, do, cout, ho_d, wp)[..., :wo_d]
    out = out[:, :, :, ::sh, ::sw]
    return jnp.transpose(out, (0, 2, 1, 3, 4))


def basic_conv3d_ref(x, w, gamma, beta, running_mean, running_var, *,
                     stride=1, padding=0, dilation=1, eps=1e-5):
    """Pure-JAX reference mirroring BasicConv3d.forward (eval-mode BN, f32)."""
    sd, sh, sw = _triple(stride)
    pd, ph, pw = _triple(padding)
    dd, dh, dw = _triple(dilation)
    conv = lax.conv_general_dilated(
        x, w, window_strides=(sd, sh, sw),
        padding=[(pd, pd), (ph, ph), (pw, pw)],
        rhs_dilation=(dd, dh, dw),
        dimension_numbers=("NCDHW", "OIDHW", "NCDHW"),
        precision=lax.Precision.HIGHEST)
    c = lambda v: v[None, :, None, None, None]
    y = (conv - c(running_mean)) * c(gamma / jnp.sqrt(running_var + eps)) + c(beta)
    return jnp.maximum(y, 0.0)


if __name__ == "__main__":
    key = jax.random.PRNGKey(0)
    N, CIN, COUT, D, H, W = 2, 8, 16, 6, 10, 10

    configs = [
        dict(k=3, stride=1, padding=1, dilation=1),   # typical BasicConv3d use
        dict(k=3, stride=2, padding=1, dilation=1),   # strided variant
        dict(k=1, stride=1, padding=0, dilation=1),   # 1x1x1 projection
    ]

    for cfg in configs:
        key, kx, kw, kg, kb, km, kv = jax.random.split(key, 7)
        k = cfg["k"]
        x = jax.random.normal(kx, (N, CIN, D, H, W), dtype=jnp.float32)
        w = jax.random.normal(kw, (COUT, CIN, k, k, k), dtype=jnp.float32) * 0.1
        gamma = 1.0 + 0.1 * jax.random.normal(kg, (COUT,), dtype=jnp.float32)
        beta = 0.1 * jax.random.normal(kb, (COUT,), dtype=jnp.float32)
        mean = 0.1 * jax.random.normal(km, (COUT,), dtype=jnp.float32)
        var = jax.nn.softplus(jax.random.normal(kv, (COUT,), dtype=jnp.float32)) + 0.5

        out = basic_conv3d(x, w, gamma, beta, mean, var,
                           stride=cfg["stride"], padding=cfg["padding"],
                           dilation=cfg["dilation"])
        out = jax.block_until_ready(out)

        ref = basic_conv3d_ref(x, w, gamma, beta, mean, var,
                               stride=cfg["stride"], padding=cfg["padding"],
                               dilation=cfg["dilation"])
        assert out.shape == ref.shape, (out.shape, ref.shape)
        # bf16 MXU operands vs f32-HIGHEST reference -> bf16-appropriate tol.
        assert jnp.allclose(out, ref, atol=6e-2, rtol=6e-2), \
            f"mismatch vs reference for config {cfg}"

    print("KERNEL_OK")
</pallas_src>

<mosaic_0001>
module attributes {stable_mosaic.version = 11 : i64} {
  func.func @conv_bn_relu_kernel(%arg0: i32, %arg1: i32, %arg2: memref<1x8x16x156xbf16, #tpu.memory_space<vmem>>, %arg3: memref<16x432xbf16, #tpu.memory_space<vmem>>, %arg4: memref<16x1xf32, #tpu.memory_space<vmem>>, %arg5: memref<1x1x16x128xf32, #tpu.memory_space<vmem>>, %arg6: memref<432x128xbf16, #tpu.memory_space<vmem>>) attributes {dimension_semantics = [#tpu.dimension_semantics<parallel>, #tpu.dimension_semantics<parallel>], iteration_bounds = array<i64: 2, 6>, scalar_prefetch = 0 : i64, scratch_operands = 1 : i64, tpu.core_type = #tpu.core_type<tc>, window_params = [{transform_indices = @transform_0, window_bounds = array<i64: 1, 8, 16, 156>}, {pipeline_mode = #tpu.pipeline_mode<synchronous>, transform_indices = @transform_1, window_bounds = array<i64: 16, 432>}, {pipeline_mode = #tpu.pipeline_mode<synchronous>, transform_indices = @transform_2, window_bounds = array<i64: 16, 1>}, {transform_indices = @transform_3, window_bounds = array<i64: 1, 1, 16, 128>}]} {
    %c1_i32 = arith.constant 1 : i32
    %0 = arith.muli %arg1, %c1_i32 : i32
    %c0_i32 = arith.constant 0 : i32
    %1 = arith.addi %0, %c0_i32 : i32
    %c0 = arith.constant 0 : index
    %2 = arith.index_cast %1 : i32 to index
    %c0_0 = arith.constant 0 : index
    %c0_1 = arith.constant 0 : index
    %3 = vector.load %arg2[%c0, %2, %c0_0, %c0_1] : memref<1x8x16x156xbf16, #tpu.memory_space<vmem>>, vector<1x1x16x128xbf16>
    %4 = vector.shape_cast %3 : vector<1x1x16x128xbf16> to vector<16x128xbf16>
    %c0_2 = arith.constant 0 : index
    %c0_3 = arith.constant 0 : index
    %5 = vector.load %arg6[%c0_2, %c0_3] : memref<432x128xbf16, #tpu.memory_space<vmem>>, vector<16x128xbf16>
    tpu.vector_store %arg6[%c0_2, %c0_3], %4 {strides = array<i32>} : memref<432x128xbf16, #tpu.memory_space<vmem>>, vector<16x128xbf16>,
    %c0_4 = arith.constant 0 : index
    %6 = arith.index_cast %1 : i32 to index
    %c0_5 = arith.constant 0 : index
    %c1 = arith.constant 1 : index
    %7 = vector.load %arg2[%c0_4, %6, %c0_5, %c1] : memref<1x8x16x156xbf16, #tpu.memory_space<vmem>>, vector<1x1x16x128xbf16>
    %8 = vector.shape_cast %7 : vector<1x1x16x128xbf16> to vector<16x128xbf16>
    %c16 = arith.constant 16 : index
    %c0_6 = arith.constant 0 : index
    %9 = vector.load %arg6[%c16, %c0_6] : memref<432x128xbf16, #tpu.memory_space<vmem>>, vector<16x128xbf16>
    tpu.vector_store %arg6[%c16, %c0_6], %8 {strides = array<i32>} : memref<432x128xbf16, #tpu.memory_space<vmem>>, vector<16x128xbf16>,
    %c0_7 = arith.constant 0 : index
    %10 = arith.index_cast %1 : i32 to index
    %c0_8 = arith.constant 0 : index
    %c2 = arith.constant 2 : index
    %11 = vector.load %arg2[%c0_7, %10, %c0_8, %c2] : memref<1x8x16x156xbf16, #tpu.memory_space<vmem>>, vector<1x1x16x128xbf16>
    %12 = vector.shape_cast %11 : vector<1x1x16x128xbf16> to vector<16x128xbf16>
    %c32 = arith.constant 32 : index
    %c0_9 = arith.constant 0 : index
    %13 = vector.load %arg6[%c32, %c0_9] : memref<432x128xbf16, #tpu.memory_space<vmem>>, vector<16x128xbf16>
    tpu.vector_store %arg6[%c32, %c0_9], %12 {strides = array<i32>} : memref<432x128xbf16, #tpu.memory_space<vmem>>, vector<16x128xbf16>,
    %c0_10 = arith.constant 0 : index
    %14 = arith.index_cast %1 : i32 to index
    %c0_11 = arith.constant 0 : index
    %c12 = arith.constant 12 : index
    %15 = vector.load %arg2[%c0_10, %14, %c0_11, %c12] : memref<1x8x16x156xbf16, #tpu.memory_space<vmem>>, vector<1x1x16x128xbf16>
    %16 = vector.shape_cast %15 : vector<1x1x16x128xbf16> to vector<16x128xbf16>
    %c48 = arith.constant 48 : index
    %c0_12 = arith.constant 0 : index
    %17 = vector.load %arg6[%c48, %c0_12] : memref<432x128xbf16, #tpu.memory_space<vmem>>, vector<16x128xbf16>
    tpu.vector_store %arg6[%c48, %c0_12], %16 {strides = array<i32>} : memref<432x128xbf16, #tpu.memory_space<vmem>>, vector<16x128xbf16>,
    %c0_13 = arith.constant 0 : index
    %18 = arith.index_cast %1 : i32 to index
    %c0_14 = arith.constant 0 : index
    %c13 = arith.constant 13 : index
    %19 = vector.load %arg2[%c0_13, %18, %c0_14, %c13] : memref<1x8x16x156xbf16, #tpu.memory_space<vmem>>, vector<1x1x16x128xbf16>
    %20 = vector.shape_cast %19 : vector<1x1x16x128xbf16> to vector<16x128xbf16>
    %c64 = arith.constant 64 : index
    %c0_15 = arith.constant 0 : index
    %21 = vector.load %arg6[%c64, %c0_15] : memref<432x128xbf16, #tpu.memory_space<vmem>>, vector<16x128xbf16>
    tpu.vector_store %arg6[%c64, %c0_15], %20 {strides = array<i32>} : memref<432x128xbf16, #tpu.memory_space<vmem>>, vector<16x128xbf16>,
    %c0_16 = arith.constant 0 : index
    %22 = arith.index_cast %1 : i32 to index
    %c0_17 = arith.constant 0 : index
    %c14 = arith.constant 14 : index
    %23 = vector.load %arg2[%c0_16, %22, %c0_17, %c14] : memref<1x8x16x156xbf16, #tpu.memory_space<vmem>>, vector<1x1x16x128xbf16>
    %24 = vector.shape_cast %23 : vector<1x1x16x128xbf16> to vector<16x128xbf16>
    %c80 = arith.constant 80 : index
    %c0_18 = arith.constant 0 : index
    %25 = vector.load %arg6[%c80, %c0_18] : memref<432x128xbf16, #tpu.memory_space<vmem>>, vector<16x128xbf16>
    tpu.vector_store %arg6[%c80, %c0_18], %24 {strides = array<i32>} : memref<432x128xbf16, #tpu.memory_space<vmem>>, vector<16x128xbf16>,
    %c0_19 = arith.constant 0 : index
    %26 = arith.index_cast %1 : i32 to index
    %c0_20 = arith.constant 0 : index
    %c24 = arith.constant 24 : index
    %27 = vector.load %arg2[%c0_19, %26, %c0_20, %c24] : memref<1x8x16x156xbf16, #tpu.memory_space<vmem>>, vector<1x1x16x128xbf16>
    %28 = vector.shape_cast %27 : vector<1x1x16x128xbf16> to vector<16x128xbf16>
    %c96 = arith.constant 96 : index
    %c0_21 = arith.constant 0 : index
    %29 = vector.load %arg6[%c96, %c0_21] : memref<432x128xbf16, #tpu.memory_space<vmem>>, vector<16x128xbf16>
    tpu.vector_store %arg6[%c96, %c0_21], %28 {strides = array<i32>} : memref<432x128xbf16, #tpu.memory_space<vmem>>, vector<16x128xbf16>,
    %c0_22 = arith.constant 0 : index
    %30 = arith.index_cast %1 : i32 to index
    %c0_23 = arith.constant 0 : index
    %c25 = arith.constant 25 : index
    %31 = vector.load %arg2[%c0_22, %30, %c0_23, %c25] : memref<1x8x16x156xbf16, #tpu.memory_space<vmem>>, vector<1x1x16x128xbf16>
    %32 = vector.shape_cast %31 : vector<1x1x16x128xbf16> to vector<16x128xbf16>
    %c112 = arith.constant 112 : index
    %c0_24 = arith.constant 0 : index
    %33 = vector.load %arg6[%c112, %c0_24] : memref<432x128xbf16, #tpu.memory_space<vmem>>, vector<16x128xbf16>
    tpu.vector_store %arg6[%c112, %c0_24], %32 {strides = array<i32>} : memref<432x128xbf16, #tpu.memory_space<vmem>>, vector<16x128xbf16>,
    %c0_25 = arith.constant 0 : index
    %34 = arith.index_cast %1 : i32 to index
    %c0_26 = arith.constant 0 : index
    %c26 = arith.constant 26 : index
    %35 = vector.load %arg2[%c0_25, %34, %c0_26, %c26] : memref<1x8x16x156xbf16, #tpu.memory_space<vmem>>, vector<1x1x16x128xbf16>
    %36 = vector.shape_cast %35 : vector<1x1x16x128xbf16> to vector<16x128xbf16>
    %c128 = arith.constant 128 : index
    %c0_27 = arith.constant 0 : index
    %37 = vector.load %arg6[%c128, %c0_27] : memref<432x128xbf16, #tpu.memory_space<vmem>>, vector<16x128xbf16>
    tpu.vector_store %arg6[%c128, %c0_27], %36 {strides = array<i32>} : memref<432x128xbf16, #tpu.memory_space<vmem>>, vector<16x128xbf16>,
    %c1_i32_28 = arith.constant 1 : i32
    %38 = arith.addi %0, %c1_i32_28 : i32
    %c0_29 = arith.constant 0 : index
    %39 = arith.index_cast %38 : i32 to index
    %c0_30 = arith.constant 0 : index
    %c0_31 = arith.constant 0 : index
    %40 = vector.load %arg2[%c0_29, %39, %c0_30, %c0_31] : memref<1x8x16x156xbf16, #tpu.memory_space<vmem>>, vector<1x1x16x128xbf16>
    %41 = vector.shape_cast %40 : vector<1x1x16x128xbf16> to vector<16x128xbf16>
    %c144 = arith.constant 144 : index
    %c0_32 = arith.constant 0 : index
    %42 = vector.load %arg6[%c144, %c0_32] : memref<432x128xbf16, #tpu.memory_space<vmem>>, vector<16x128xbf16>
    tpu.vector_store %arg6[%c144, %c0_32], %41 {strides = array<i32>} : memref<432x128xbf16, #tpu.memory_space<vmem>>, vector<16x128xbf16>,
    %c0_33 = arith.constant 0 : index
    %43 = arith.index_cast %38 : i32 to index
    %c0_34 = arith.constant 0 : index
    %c1_35 = arith.constant 1 : index
    %44 = vector.load %arg2[%c0_33, %43, %c0_34, %c1_35] : memref<1x8x16x156xbf16, #tpu.memory_space<vmem>>, vector<1x1x16x128xbf16>
    %45 = vector.shape_cast %44 : vector<1x1x16x128xbf16> to vector<16x128xbf16>
    %c160 = arith.constant 160 : index
    %c0_36 = arith.constant 0 : index
    %46 = vector.load %arg6[%c160, %c0_36] : memref<432x128xbf16, #tpu.memory_space<vmem>>, vector<16x128xbf16>
    tpu.vector_store %arg6[%c160, %c0_36], %45 {strides = array<i32>} : memref<432x128xbf16, #tpu.memory_space<vmem>>, vector<16x128xbf16>,
    %c0_37 = arith.constant 0 : index
    %47 = arith.index_cast %38 : i32 to index
    %c0_38 = arith.constant 0 : index
    %c2_39 = arith.constant 2 : index
    %48 = vector.load %arg2[%c0_37, %47, %c0_38, %c2_39] : memref<1x8x16x156xbf16, #tpu.memory_space<vmem>>, vector<1x1x16x128xbf16>
    %49 = vector.shape_cast %48 : vector<1x1x16x128xbf16> to vector<16x128xbf16>
    %c176 = arith.constant 176 : index
    %c0_40 = arith.constant 0 : index
    %50 = vector.load %arg6[%c176, %c0_40] : memref<432x128xbf16, #tpu.memory_space<vmem>>, vector<16x128xbf16>
    tpu.vector_store %arg6[%c176, %c0_40], %49 {strides = array<i32>} : memref<432x128xbf16, #tpu.memory_space<vmem>>, vector<16x128xbf16>,
    %c0_41 = arith.constant 0 : index
    %51 = arith.index_cast %38 : i32 to index
    %c0_42 = arith.constant 0 : index
    %c12_43 = arith.constant 12 : index
    %52 = vector.load %arg2[%c0_41, %51, %c0_42, %c12_43] : memref<1x8x16x156xbf16, #tpu.memory_space<vmem>>, vector<1x1x16x128xbf16>
    %53 = vector.shape_cast %52 : vector<1x1x16x128xbf16> to vector<16x128xbf16>
    %c192 = arith.constant 192 : index
    %c0_44 = arith.constant 0 : index
    %54 = vector.load %arg6[%c192, %c0_44] : memref<432x128xbf16, #tpu.memory_space<vmem>>, vector<16x128xbf16>
    tpu.vector_store %arg6[%c192, %c0_44], %53 {strides = array<i32>} : memref<432x128xbf16, #tpu.memory_space<vmem>>, vector<16x128xbf16>,
    %c0_45 = arith.constant 0 : index
    %55 = arith.index_cast %38 : i32 to index
    %c0_46 = arith.constant 0 : index
    %c13_47 = arith.constant 13 : index
    %56 = vector.load %arg2[%c0_45, %55, %c0_46, %c13_47] : memref<1x8x16x156xbf16, #tpu.memory_space<vmem>>, vector<1x1x16x128xbf16>
    %57 = vector.shape_cast %56 : vector<1x1x16x128xbf16> to vector<16x128xbf16>
    %c208 = arith.constant 208 : index
    %c0_48 = arith.constant 0 : index
    %58 = vector.load %arg6[%c208, %c0_48] : memref<432x128xbf16, #tpu.memory_space<vmem>>, vector<16x128xbf16>
    tpu.vector_store %arg6[%c208, %c0_48], %57 {strides = array<i32>} : memref<432x128xbf16, #tpu.memory_space<vmem>>, vector<16x128xbf16>,
    %c0_49 = arith.constant 0 : index
    %59 = arith.index_cast %38 : i32 to index
    %c0_50 = arith.constant 0 : index
    %c14_51 = arith.constant 14 : index
    %60 = vector.load %arg2[%c0_49, %59, %c0_50, %c14_51] : memref<1x8x16x156xbf16, #tpu.memory_space<vmem>>, vector<1x1x16x128xbf16>
    %61 = vector.shape_cast %60 : vector<1x1x16x128xbf16> to vector<16x128xbf16>
    %c224 = arith.constant 224 : index
    %c0_52 = arith.constant 0 : index
    %62 = vector.load %arg6[%c224, %c0_52] : memref<432x128xbf16, #tpu.memory_space<vmem>>, vector<16x128xbf16>
    tpu.vector_store %arg6[%c224, %c0_52], %61 {strides = array<i32>} : memref<432x128xbf16, #tpu.memory_space<vmem>>, vector<16x128xbf16>,
    %c0_53 = arith.constant 0 : index
    %63 = arith.index_cast %38 : i32 to index
    %c0_54 = arith.constant 0 : index
    %c24_55 = arith.constant 24 : index
    %64 = vector.load %arg2[%c0_53, %63, %c0_54, %c24_55] : memref<1x8x16x156xbf16, #tpu.memory_space<vmem>>, vector<1x1x16x128xbf16>
    %65 = vector.shape_cast %64 : vector<1x1x16x128xbf16> to vector<16x128xbf16>
    %c240 = arith.constant 240 : index
    %c0_56 = arith.constant 0 : index
    %66 = vector.load %arg6[%c240, %c0_56] : memref<432x128xbf16, #tpu.memory_space<vmem>>, vector<16x128xbf16>
    tpu.vector_store %arg6[%c240, %c0_56], %65 {strides = array<i32>} : memref<432x128xbf16, #tpu.memory_space<vmem>>, vector<16x128xbf16>,
    %c0_57 = arith.constant 0 : index
    %67 = arith.index_cast %38 : i32 to index
    %c0_58 = arith.constant 0 : index
    %c25_59 = arith.constant 25 : index
    %68 = vector.load %arg2[%c0_57, %67, %c0_58, %c25_59] : memref<1x8x16x156xbf16, #tpu.memory_space<vmem>>, vector<1x1x16x128xbf16>
    %69 = vector.shape_cast %68 : vector<1x1x16x128xbf16> to vector<16x128xbf16>
    %c256 = arith.constant 256 : index
    %c0_60 = arith.constant 0 : index
    %70 = vector.load %arg6[%c256, %c0_60] : memref<432x128xbf16, #tpu.memory_space<vmem>>, vector<16x128xbf16>
    tpu.vector_store %arg6[%c256, %c0_60], %69 {strides = array<i32>} : memref<432x128xbf16, #tpu.memory_space<vmem>>, vector<16x128xbf16>,
    %c0_61 = arith.constant 0 : index
    %71 = arith.index_cast %38 : i32 to index
    %c0_62 = arith.constant 0 : index
    %c26_63 = arith.constant 26 : index
    %72 = vector.load %arg2[%c0_61, %71, %c0_62, %c26_63] : memref<1x8x16x156xbf16, #tpu.memory_space<vmem>>, vector<1x1x16x128xbf16>
    %73 = vector.shape_cast %72 : vector<1x1x16x128xbf16> to vector<16x128xbf16>
    %c272 = arith.constant 272 : index
    %c0_64 = arith.constant 0 : index
    %74 = vector.load %arg6[%c272, %c0_64] : memref<432x128xbf16, #tpu.memory_space<vmem>>, vector<16x128xbf16>
    tpu.vector_store %arg6[%c272, %c0_64], %73 {strides = array<i32>} : memref<432x128xbf16, #tpu.memory_space<vmem>>, vector<16x128xbf16>,
    %c2_i32 = arith.constant 2 : i32
    %75 = arith.addi %0, %c2_i32 : i32
    %c0_65 = arith.constant 0 : index
    %76 = arith.index_cast %75 : i32 to index
    %c0_66 = arith.constant 0 : index
    %c0_67 = arith.constant 0 : index
    %77 = vector.load %arg2[%c0_65, %76, %c0_66, %c0_67] : memref<1x8x16x156xbf16, #tpu.memory_space<vmem>>, vector<1x1x16x128xbf16>
    %78 = vector.shape_cast %77 : vector<1x1x16x128xbf16> to vector<16x128xbf16>
    %c288 = arith.constant 288 : index
    %c0_68 = arith.constant 0 : index
    %79 = vector.load %arg6[%c288, %c0_68] : memref<432x128xbf16, #tpu.memory_space<vmem>>, vector<16x128xbf16>
    tpu.vector_store %arg6[%c288, %c0_68], %78 {strides = array<i32>} : memref<432x128xbf16, #tpu.memory_space<vmem>>, vector<16x128xbf16>,
    %c0_69 = arith.constant 0 : index
    %80 = arith.index_cast %75 : i32 to index
    %c0_70 = arith.constant 0 : index
    %c1_71 = arith.constant 1 : index
    %81 = vector.load %arg2[%c0_69, %80, %c0_70, %c1_71] : memref<1x8x16x156xbf16, #tpu.memory_space<vmem>>, vector<1x1x16x128xbf16>
    %82 = vector.shape_cast %81 : vector<1x1x16x128xbf16> to vector<16x128xbf16>
    %c304 = arith.constant 304 : index
    %c0_72 = arith.constant 0 : index
    %83 = vector.load %arg6[%c304, %c0_72] : memref<432x128xbf16, #tpu.memory_space<vmem>>, vector<16x128xbf16>
    tpu.vector_store %arg6[%c304, %c0_72], %82 {strides = array<i32>} : memref<432x128xbf16, #tpu.memory_space<vmem>>, vector<16x128xbf16>,
    %c0_73 = arith.constant 0 : index
    %84 = arith.index_cast %75 : i32 to index
    %c0_74 = arith.constant 0 : index
    %c2_75 = arith.constant 2 : index
    %85 = vector.load %arg2[%c0_73, %84, %c0_74, %c2_75] : memref<1x8x16x156xbf16, #tpu.memory_space<vmem>>, vector<1x1x16x128xbf16>
    %86 = vector.shape_cast %85 : vector<1x1x16x128xbf16> to vector<16x128xbf16>
    %c320 = arith.constant 320 : index
    %c0_76 = arith.constant 0 : index
    %87 = vector.load %arg6[%c320, %c0_76] : memref<432x128xbf16, #tpu.memory_space<vmem>>, vector<16x128xbf16>
    tpu.vector_store %arg6[%c320, %c0_76], %86 {strides = array<i32>} : memref<432x128xbf16, #tpu.memory_space<vmem>>, vector<16x128xbf16>,
    %c0_77 = arith.constant 0 : index
    %88 = arith.index_cast %75 : i32 to index
    %c0_78 = arith.constant 0 : index
    %c12_79 = arith.constant 12 : index
    %89 = vector.load %arg2[%c0_77, %88, %c0_78, %c12_79] : memref<1x8x16x156xbf16, #tpu.memory_space<vmem>>, vector<1x1x16x128xbf16>
    %90 = vector.shape_cast %89 : vector<1x1x16x128xbf16> to vector<16x128xbf16>
    %c336 = arith.constant 336 : index
    %c0_80 = arith.constant 0 : index
    %91 = vector.load %arg6[%c336, %c0_80] : memref<432x128xbf16, #tpu.memory_space<vmem>>, vector<16x128xbf16>
    tpu.vector_store %arg6[%c336, %c0_80], %90 {strides = array<i32>} : memref<432x128xbf16, #tpu.memory_space<vmem>>, vector<16x128xbf16>,
    %c0_81 = arith.constant 0 : index
    %92 = arith.index_cast %75 : i32 to index
    %c0_82 = arith.constant 0 : index
    %c13_83 = arith.constant 13 : index
    %93 = vector.load %arg2[%c0_81, %92, %c0_82, %c13_83] : memref<1x8x16x156xbf16, #tpu.memory_space<vmem>>, vector<1x1x16x128xbf16>
    %94 = vector.shape_cast %93 : vector<1x1x16x128xbf16> to vector<16x128xbf16>
    %c352 = arith.constant 352 : index
    %c0_84 = arith.constant 0 : index
    %95 = vector.load %arg6[%c352, %c0_84] : memref<432x128xbf16, #tpu.memory_space<vmem>>, vector<16x128xbf16>
    tpu.vector_store %arg6[%c352, %c0_84], %94 {strides = array<i32>} : memref<432x128xbf16, #tpu.memory_space<vmem>>, vector<16x128xbf16>,
    %c0_85 = arith.constant 0 : index
    %96 = arith.index_cast %75 : i32 to index
    %c0_86 = arith.constant 0 : index
    %c14_87 = arith.constant 14 : index
    %97 = vector.load %arg2[%c0_85, %96, %c0_86, %c14_87] : memref<1x8x16x156xbf16, #tpu.memory_space<vmem>>, vector<1x1x16x128xbf16>
    %98 = vector.shape_cast %97 : vector<1x1x16x128xbf16> to vector<16x128xbf16>
    %c368 = arith.constant 368 : index
    %c0_88 = arith.constant 0 : index
    %99 = vector.load %arg6[%c368, %c0_88] : memref<432x128xbf16, #tpu.memory_space<vmem>>, vector<16x128xbf16>
    tpu.vector_store %arg6[%c368, %c0_88], %98 {strides = array<i32>} : memref<432x128xbf16, #tpu.memory_space<vmem>>, vector<16x128xbf16>,
    %c0_89 = arith.constant 0 : index
    %100 = arith.index_cast %75 : i32 to index
    %c0_90 = arith.constant 0 : index
    %c24_91 = arith.constant 24 : index
    %101 = vector.load %arg2[%c0_89, %100, %c0_90, %c24_91] : memref<1x8x16x156xbf16, #tpu.memory_space<vmem>>, vector<1x1x16x128xbf16>
    %102 = vector.shape_cast %101 : vector<1x1x16x128xbf16> to vector<16x128xbf16>
    %c384 = arith.constant 384 : index
    %c0_92 = arith.constant 0 : index
    %103 = vector.load %arg6[%c384, %c0_92] : memref<432x128xbf16, #tpu.memory_space<vmem>>, vector<16x128xbf16>
    tpu.vector_store %arg6[%c384, %c0_92], %102 {strides = array<i32>} : memref<432x128xbf16, #tpu.memory_space<vmem>>, vector<16x128xbf16>,
    %c0_93 = arith.constant 0 : index
    %104 = arith.index_cast %75 : i32 to index
    %c0_94 = arith.constant 0 : index
    %c25_95 = arith.constant 25 : index
    %105 = vector.load %arg2[%c0_93, %104, %c0_94, %c25_95] : memref<1x8x16x156xbf16, #tpu.memory_space<vmem>>, vector<1x1x16x128xbf16>
    %106 = vector.shape_cast %105 : vector<1x1x16x128xbf16> to vector<16x128xbf16>
    %c400 = arith.constant 400 : index
    %c0_96 = arith.constant 0 : index
    %107 = vector.load %arg6[%c400, %c0_96] : memref<432x128xbf16, #tpu.memory_space<vmem>>, vector<16x128xbf16>
    tpu.vector_store %arg6[%c400, %c0_96], %106 {strides = array<i32>} : memref<432x128xbf16, #tpu.memory_space<vmem>>, vector<16x128xbf16>,
    %c0_97 = arith.constant 0 : index
    %108 = arith.index_cast %75 : i32 to index
    %c0_98 = arith.constant 0 : index
    %c26_99 = arith.constant 26 : index
    %109 = vector.load %arg2[%c0_97, %108, %c0_98, %c26_99] : memref<1x8x16x156xbf16, #tpu.memory_space<vmem>>, vector<1x1x16x128xbf16>
    %110 = vector.shape_cast %109 : vector<1x1x16x128xbf16> to vector<16x128xbf16>
    %c416 = arith.constant 416 : index
    %c0_100 = arith.constant 0 : index
    %111 = vector.load %arg6[%c416, %c0_100] : memref<432x128xbf16, #tpu.memory_space<vmem>>, vector<16x128xbf16>
    tpu.vector_store %arg6[%c416, %c0_100], %110 {strides = array<i32>} : memref<432x128xbf16, #tpu.memory_space<vmem>>, vector<16x128xbf16>,
    %c0_101 = arith.constant 0 : index
    %c0_102 = arith.constant 0 : index
    %112 = vector.load %arg3[%c0_101, %c0_102] : memref<16x432xbf16, #tpu.memory_space<vmem>>, vector<16x432xbf16>
    %c0_103 = arith.constant 0 : index
    %c0_104 = arith.constant 0 : index
    %113 = vector.load %arg6[%c0_103, %c0_104] : memref<432x128xbf16, #tpu.memory_space<vmem>>, vector<432x128xbf16>
    %cst = arith.constant dense<0.000000e+00> : vector<16x128xf32>
    %114 = tpu.matmul %112, %113, %cst {dimension_numbers = #tpu.dot_dimension_numbers<[1], [0], [0], [1], [0, 0, 1, 1], [], []>} : vector<16x432xbf16>, vector<432x128xbf16>, vector<16x128xf32> -> vector<16x128xf32>
    %c0_105 = arith.constant 0 : index
    %c0_106 = arith.constant 0 : index
    %115 = vector.load %arg4[%c0_105, %c0_106] : memref<16x1xf32, #tpu.memory_space<vmem>>, vector<16x1xf32>
    %116 = vector.broadcast %115 : vector<16x1xf32> to vector<16x128xf32>
    %117 = arith.addf %114, %116 : vector<16x128xf32>
    %cst_107 = arith.constant 0.000000e+00 : f32
    %118 = vector.broadcast %cst_107 : f32 to vector<16x128xf32>
    %119 = arith.maximumf %117, %118 : vector<16x128xf32>
    %c0_108 = arith.constant 0 : index
    %c0_109 = arith.constant 0 : index
    %c0_110 = arith.constant 0 : index
    %c0_111 = arith.constant 0 : index
    %120 = vector.load %arg5[%c0_108, %c0_109, %c0_110, %c0_111] : memref<1x1x16x128xf32, #tpu.memory_space<vmem>>, vector<1x1x16x128xf32>
    %121 = vector.shape_cast %120 : vector<1x1x16x128xf32> to vector<16x128xf32>
    %122 = vector.shape_cast %119 : vector<16x128xf32> to vector<1x1x16x128xf32>
    tpu.vector_store %arg5[%c0_108, %c0_109, %c0_110, %c0_111], %122 {strides = array<i32>} : memref<1x1x16x128xf32, #tpu.memory_space<vmem>>, vector<1x1x16x128xf32>,
    return
  }
  func.func @transform_0(%arg0: i32, %arg1: i32) -> (i32, i32, i32, i32) {
    %c0_i32 = arith.constant 0 : i32
    %c0_i32_0 = arith.constant 0 : i32
    %c0_i32_1 = arith.constant 0 : i32
    %c0_i32_2 = arith.constant 0 : i32
    return %arg0, %c0_i32, %c0_i32_0, %c0_i32_1 : i32, i32, i32, i32
  }
  func.func @transform_1(%arg0: i32, %arg1: i32) -> (i32, i32) {
    %c0_i32 = arith.constant 0 : i32
    %c0_i32_0 = arith.constant 0 : i32
    %c0_i32_1 = arith.constant 0 : i32
    return %c0_i32, %c0_i32_0 : i32, i32
  }
  func.func @transform_2(%arg0: i32, %arg1: i32) -> (i32, i32) {
    %c0_i32 = arith.constant 0 : i32
    %c0_i32_0 = arith.constant 0 : i32
    %c0_i32_1 = arith.constant 0 : i32
    return %c0_i32, %c0_i32_0 : i32, i32
  }
  func.func @transform_3(%arg0: i32, %arg1: i32) -> (i32, i32, i32, i32) {
    %c0_i32 = arith.constant 0 : i32
    %c0_i32_0 = arith.constant 0 : i32
    %c0_i32_1 = arith.constant 0 : i32
    return %arg0, %arg1, %c0_i32, %c0_i32_0 : i32, i32, i32, i32
  }
}

</mosaic_0001>

<llo_original>
// kernel: tpu_custom_call.1
$region0: #{tpu_custom_call.1}
  #allocation0 [shape = 'u32[]', space=smem, size = 0x4, offset = 0x4, fixed_abs, tag = 'smem constant byte address 0x4 - core index']
  #allocation1 [shape = 'u32[72,128]{1,0:T(1,128)}', space=vmem, size = 0x9000, scoped, tag = 'internal scratch']
  #allocation2 [shape = 'bf16[432,128]{1,0:T(8,128)(2,1)}', space=vmem, size = 0x1b000, scoped, tag = 'scratch operand']
  %s0 = inlined_call_operand.hbm [shape: bf16[2,8,16,156], index: 0, kind: input, shape index: {}]
  %s1 = inlined_call_operand.hbm [shape: bf16[16,432], index: 1, kind: input, shape index: {}]
  %s2 = inlined_call_operand.vmem [shape: f32[16,1], index: 2, kind: input, shape index: {}]
  %s3 = inlined_call_operand.hbm [shape: f32[2,6,16,128], index: 3, kind: output, shape index: {}]
  %s4 = sld [smem:[#allocation0]]
  $region53: #{tpu_custom_call.1} parent=0
    _
  %s6 = ssub.s32 1, %s4
  %s7 = scalar_select 0, %s6, %s4
  $region1: #{tpu_custom_call.1} parent=0
    #allocation3 [shape = 'u8[131072]{0}', space=vmem, size = 0x20000, scoped, tag = 'input window, operand 0']
    #allocation4 [shape = 's32[2]{0}', space=sflag, size = 0x8, scoped, tag = 'scoped memory for tpu_custom_call.1']
    #allocation5 [shape = 's32[2]{0}', space=sflag, size = 0x8, scoped, tag = 'scoped memory for tpu_custom_call.1']
    #allocation6 [shape = 'u8[16384]{0}', space=vmem, size = 0x4000, scoped, tag = 'input window, operand 1, single buffered']
    #allocation7 [shape = 's32[1]{0}', space=sflag, size = 0x4, scoped, tag = 'scoped memory for tpu_custom_call.1']
    #allocation8 [shape = 'u8[16384]{0}', space=vmem, size = 0x4000, scoped, tag = 'output window, operand 0']
    %8 = vsyncpa [#allocation4], 0
    %s9 = scalar_lea.sflag [#allocation4], 1
    %10 = vsyncpa %s9, 0
    %11 = vsyncpa [#allocation7], 0
    %12 = vsyncpa [#allocation5], 0
    %s13 = scalar_lea.sflag [#allocation5], 1
    %14 = vsyncpa %s13, 0
    loop: start=0, step=1, limit=14
    $region2: #{tpu_custom_call.1} parent=1 // loop_pre_header
      _
    $region3: #{tpu_custom_call.1} parent=1 // loop_header
      %s16 = sphi 0, %s20
      %p17 = scmp.ge.s32.totalorder %s16, 14
      %s23 = sphi 0, %s35
      %s24 = sphi 0, %s31
      %s25 = sphi 0, %s23
      %s26 = sphi 0, %s24
      %s27 = sphi 0, %s25
      %s28 = sphi 0, %s26
      %s38 = sphi 0, %s40
      %s41 = sphi 0, %s38
      %s42 = sphi 0, %s41
      %s58 = sphi 0, %s42
      %s62 = sphi 0, %s62
      %s64 = sphi 0, %s62
      %s65 = sphi 0, %s64
      %s79 = sphi 0, %s65
      %s83 = sphi 0, %s83
      %s85 = sphi 0, %s83
      %s86 = sphi 0, %s85
      %s100 = sphi 0, %s86
      %s108 = sphi 0, %s110
      %s111 = sphi 0, %s108
      %s112 = sphi 0, %s111
      %s128 = sphi 0, %s112
    $region4: #{tpu_custom_call.1} parent=1 // loop_header_branch
      %19 = sbr.rel (%p17) target = $region8
    $region5: #{tpu_custom_call.1} parent=1 // loop_body
      %s21 = ssub.s32 %s16, 1
      %s22 = ssub.s32 %s16, 2
      %s29 = sadd.s32 1, %s24
      %p30 = scmp.ge.s32.totalorder %s29, 6
      %s31 = scalar_select %p30, 0, %s29
      %s32 = sadd.s32 1, %s23
      %s33 = scalar_select %p30, %s32, %s23
      %p34 = scmp.ge.s32.totalorder %s33, 2
      %s35 = scalar_select %p34, 0, %s33
      %s36 = ssub.s32 %s23, %s35
      %p37 = scmp.eq.s32.totalorder %s36, 0
      %s39 = sadd.s32 %s38, 1
      %s40 = scalar_select %p37, %s38, %s39
      %p43 = pneg %p37
      %p44 = scmp.eq.s32.totalorder %s16, 11
      %p45 = por %p43, %p44
      %p46 = scmp.ne.s32.totalorder %s38, %s41
      %p47 = scmp.eq.s32.totalorder %s16, 0
      %p48 = por %p46, %p47
      %p49 = scmp.ne.s32.totalorder %s38, %s41
      %p50 = scmp.eq.s32.totalorder %s21, 11
      %p51 = por %p49, %p50
      %p52 = scmp.ne.s32.totalorder %s41, %s42
      %p53 = scmp.eq.s32.totalorder %s21, 0
      %p54 = por %p52, %p53
      %p55 = scmp.ne.s32.totalorder %s41, %s42
      %p56 = scmp.eq.s32.totalorder %s22, 11
      %p57 = por %p55, %p56
      %p59 = scmp.ne.s32.totalorder %s42, %s58
      %p60 = scmp.eq.s32.totalorder %s22, 0
      %p61 = por %p59, %p60
      %s63 = sadd.s32 %s62, 1
      %p66 = scmp.eq.s32.totalorder %s16, 11
      %p67 = scmp.ne.s32.totalorder %s62, %s64
      %p68 = scmp.eq.s32.totalorder %s16, 0
      %p69 = por %p67, %p68
      %p70 = scmp.ne.s32.totalorder %s62, %s64
      %p71 = scmp.eq.s32.totalorder %s21, 11
      %p72 = por %p70, %p71
      %p73 = scmp.ne.s32.totalorder %s64, %s65
      %p74 = scmp.eq.s32.totalorder %s21, 0
      %p75 = por %p73, %p74
      %p76 = scmp.ne.s32.totalorder %s64, %s65
      %p77 = scmp.eq.s32.totalorder %s22, 11
      %p78 = por %p76, %p77
      %p80 = scmp.ne.s32.totalorder %s65, %s79
      %p81 = scmp.eq.s32.totalorder %s22, 0
      %p82 = por %p80, %p81
      %s84 = sadd.s32 %s83, 1
      %p87 = scmp.eq.s32.totalorder %s16, 11
      %p88 = scmp.ne.s32.totalorder %s83, %s85
      %p89 = scmp.eq.s32.totalorder %s16, 0
      %p90 = por %p88, %p89
      %p91 = scmp.ne.s32.totalorder %s83, %s85
      %p92 = scmp.eq.s32.totalorder %s21, 11
      %p93 = por %p91, %p92
      %p94 = scmp.ne.s32.totalorder %s85, %s86
      %p95 = scmp.eq.s32.totalorder %s21, 0
      %p96 = por %p94, %p95
      %p97 = scmp.ne.s32.totalorder %s85, %s86
      %p98 = scmp.eq.s32.totalorder %s22, 11
      %p99 = por %p97, %p98
      %p101 = scmp.ne.s32.totalorder %s86, %s100
      %p102 = scmp.eq.s32.totalorder %s22, 0
      %p103 = por %p101, %p102
      %s104 = ssub.s32 %s23, %s35
      %s105 = ssub.s32 %s24, %s31
      %s106 = sor.u32 %s104, %s105
      %p107 = scmp.eq.s32.totalorder %s106, 0
      %s109 = sadd.s32 %s108, 1
      %s110 = scalar_select %p107, %s108, %s109
      %p113 = pneg %p107
      %p114 = scmp.eq.s32.totalorder %s16, 11
      %p115 = por %p113, %p114
      %p116 = scmp.ne.s32.totalorder %s108, %s111
      %p117 = scmp.eq.s32.totalorder %s16, 0
      %p118 = por %p116, %p117
      %p119 = scmp.ne.s32.totalorder %s108, %s111
      %p120 = scmp.eq.s32.totalorder %s21, 11
      %p121 = por %p119, %p120
      %p122 = scmp.ne.s32.totalorder %s111, %s112
      %p123 = scmp.eq.s32.totalorder %s21, 0
      %p124 = por %p122, %p123
      %p125 = scmp.ne.s32.totalorder %s111, %s112
      %p126 = scmp.eq.s32.totalorder %s22, 11
      %p127 = por %p125, %p126
      %p129 = scmp.ne.s32.totalorder %s112, %s128
      %p130 = scmp.eq.s32.totalorder %s22, 0
      %p131 = por %p129, %p130
      %p132 = scmp.le.s32.totalorder 1, %s16
      %p133 = scmp.lt.s32.totalorder %s16, 13
      %p134 = pnand %p132, %p133
      %p135 = pneg %p134
      // Predicated region
      $region9: #{tpu_custom_call.1} parent=5 // pred_check
        _
      $region10: #{tpu_custom_call.1} parent=5 // pred_check_branch
        %137 = sbr.rel (%p134) target = $region12
      $region11: #{tpu_custom_call.1} parent=5 // pred_region
        %s138 = ssub.s32 %s16, 1
        // Predicated region
        $region13: #{tpu_custom_call.1} parent=11 // pred_check
          %p139 = pneg %p75
        $region14: #{tpu_custom_call.1} parent=11 // pred_check_branch
          %141 = sbr.rel (%p139) target = $region16
        $region15: #{tpu_custom_call.1} parent=11 // pred_region
          %143 = vsyncadd [#allocation7], 0
          %s144 = sshll.u32 %s1, 4
          %s145 = int_to_ptr.hbm [resolvable:$true] %s144
          %s146 = sshll.u32 [#allocation6], 4
          %s147 = int_to_ptr.vmem [resolvable:$true] %s146
          %152 = dma.hbm_to_vmem [thread:$0]  %s145, 512, %s147, [#allocation7], 256, 256, 16
        $region16: #{tpu_custom_call.1} parent=11 // pred_fallthru
          _
        // Predicated region
        $region17: #{tpu_custom_call.1} parent=11 // pred_check
          %p153 = pneg %p96
        $region18: #{tpu_custom_call.1} parent=11 // pred_check_branch
          %155 = sbr.rel (%p153) target = $region20
        $region19: #{tpu_custom_call.1} parent=11 // pred_region
          _
        $region20: #{tpu_custom_call.1} parent=11 // pred_fallthru
          _
      $region12: #{tpu_custom_call.1} parent=5 // pred_fallthru
        _
      %p156 = scmp.lt.s32.totalorder %s16, 12
      // Predicated region
      $region21: #{tpu_custom_call.1} parent=5 // pred_check
        %p157 = pneg %p156
      $region22: #{tpu_custom_call.1} parent=5 // pred_check_branch
        %159 = sbr.rel (%p157) target = $region24
      $region23: #{tpu_custom_call.1} parent=5 // pred_region
        // Predicated region
        $region25: #{tpu_custom_call.1} parent=23 // pred_check
          %p160 = pneg %p48
        $region26: #{tpu_custom_call.1} parent=23 // pred_check_branch
          %162 = sbr.rel (%p160) target = $region28
        $region27: #{tpu_custom_call.1} parent=23 // pred_region
          %s163 = sand.u32 %s38, 1
          %s164 = scalar_lea.sflag [#allocation4], %s163
          %s165 = sand.u32 %s38, 1
          %s166 = smul.addr %s165, 128
          %s167 = scalar_lea.vmem [#allocation3], %s166
          %169 = vsyncadd %s164, 0
          %s170 = smul.addr %s23, 32
          %s171 = smul.addr %s170, 4
          %s172 = scalar_lea.hbm %s0, %s171
          %s173 = sshll.u32 %s172, 4
          %s174 = int_to_ptr.hbm [resolvable:$true] %s173
          %s175 = sshll.u32 %s167, 4
          %s176 = int_to_ptr.vmem [resolvable:$true] %s175
          %181 = dma.hbm_to_vmem [thread:$0]  %s174, 2048, %s176, %s164, 128, 128, 8
        $region28: #{tpu_custom_call.1} parent=23 // pred_fallthru
          _
      $region24: #{tpu_custom_call.1} parent=5 // pred_fallthru
        _
      %p182 = scmp.le.s32.totalorder 1, %s16
      %p183 = scmp.lt.s32.totalorder %s16, 13
      %p184 = pnand %p182, %p183
      %p185 = pneg %p184
      // Predicated region
      $region29: #{tpu_custom_call.1} parent=5 // pred_check
        _
      $region30: #{tpu_custom_call.1} parent=5 // pred_check_branch
        %187 = sbr.rel (%p184) target = $region32
      $region31: #{tpu_custom_call.1} parent=5 // pred_region
        %s188 = ssub.s32 %s16, 1
        %s189 = sand.u32 %s41, 1
        %s190 = scalar_lea.sflag [#allocation4], %s189
        %s191 = sand.u32 %s41, 1
        %s192 = smul.addr %s191, 128
        %s193 = scalar_lea.vmem [#allocation3], %s192
        // Predicated region
        $region33: #{tpu_custom_call.1} parent=31 // pred_check
          %p194 = pneg %p54
        $region34: #{tpu_custom_call.1} parent=31 // pred_check_branch
          %196 = sbr.rel (%p194) target = $region36
        $region35: #{tpu_custom_call.1} parent=31 // pred_region
          %198 = dma.done %s190, 2048
        $region36: #{tpu_custom_call.1} parent=31 // pred_fallthru
          _
        // Predicated region
        $region37: #{tpu_custom_call.1} parent=31 // pred_check
          %p199 = pneg %p75
        $region38: #{tpu_custom_call.1} parent=31 // pred_check_branch
          %201 = sbr.rel (%p199) target = $region40
        $region39: #{tpu_custom_call.1} parent=31 // pred_region
          %203 = dma.done [#allocation7], 512
        $region40: #{tpu_custom_call.1} parent=31 // pred_fallthru
          _
        %s204 = sand.u32 %s41, 1
        %s205 = scalar_lea.sflag [#allocation4], %s204
        %s206 = sand.u32 %s41, 1
        %s207 = smul.addr %s206, 128
        %s208 = scalar_lea.vmem [#allocation3], %s207
        %p209 = pneg %p54
        %p210 = pneg %p51
        %p211 = pneg %p75
        %p212 = pneg %p72
        %p213 = pneg %p96
        %p214 = pneg %p93
        %p215 = pneg %p124
        %p216 = pneg %p121
        %s217 = sand.u32 %s111, 1
        %s218 = scalar_lea.sflag [#allocation5], %s217
        %s219 = sand.u32 %s111, 1
        %s220 = smul.addr %s219, 16
        %s221 = scalar_lea.vmem [#allocation8], %s220
        %s223 = smul.u32 %s26, 4
        %s224 = smul.addr %s223, 4
        %s225 = scalar_lea.vmem %s193, %s224 [#allocation3]
        %v226 = vld [vmem:[%s225] sm:$0xf]
        %v227 = vld [vmem:[%s225 + $0x8] sm:$0xf]
        %228 = vst [vmem:[#allocation2] sm:$0xf] %v226
        %229 = vst [vmem:[#allocation2 + $0x4] sm:$0xf] %v227
        %v230 = vld [vmem:[%s225] sm:$0xff]
        %v231 = vld [vmem:[%s225 + $0x8] sm:$0xff]
        %234 = vrot.lane.b32.xlu0 %v230, 127
        %v235 = vpop.permute.xlu0 %234
        %236 = vrot.lane.b32.xlu0 %v231, 127
        %v237 = vpop.permute.xlu0 %236
        %v238 = vrot.slane %v235, 4
        %v239 = vrot.slane %v237, 4
        %vm240 = vcmask 1039360
        %v241 = vsel %vm240, %v235, %v238
        %v242 = vsel %vm240, %v237, %v239
        %245 = vst [vmem:[#allocation2 + $0x8] sm:$0xf] %v241
        %246 = vst [vmem:[#allocation2 + $0xc] sm:$0xf] %v242
        %v247 = vld [vmem:[%s225] sm:$0xff]
        %v248 = vld [vmem:[%s225 + $0x8] sm:$0xff]
        %251 = vrot.lane.b32.xlu0 %v247, 126
        %v252 = vpop.permute.xlu0 %251
        %253 = vrot.lane.b32.xlu0 %v248, 126
        %v254 = vpop.permute.xlu0 %253
        %v255 = vrot.slane %v252, 4
        %v256 = vrot.slane %v254, 4
        %vm257 = vcmask 1031168
        %v258 = vsel %vm257, %v252, %v255
        %v259 = vsel %vm257, %v254, %v256
        %262 = vst [vmem:[#allocation2 + $0x10] sm:$0xf] %v258
        %263 = vst [vmem:[#allocation2 + $0x14] sm:$0xf] %v259
        %v264 = vld [vmem:[%s225] sm:$0xff]
        %v265 = vld [vmem:[%s225 + $0x8] sm:$0xff]
        %268 = vrot.lane.b32.xlu0 %v264, 116
        %v269 = vpop.permute.xlu0 %268
        %270 = vrot.lane.b32.xlu0 %v265, 116
        %v271 = vpop.permute.xlu0 %270
        %v272 = vrot.slane %v269, 4
        %v273 = vrot.slane %v271, 4
        %vm274 = vcmask 949248
        %v275 = vsel %vm274, %v269, %v272
        %v276 = vsel %vm274, %v271, %v273
        %279 = vst [vmem:[#allocation2 + $0x18] sm:$0xf] %v275
        %280 = vst [vmem:[#allocation2 + $0x1c] sm:$0xf] %v276
        %v281 = vld [vmem:[%s225] sm:$0xff]
        %v282 = vld [vmem:[%s225 + $0x8] sm:$0xff]
        %285 = vrot.lane.b32.xlu0 %v281, 115
        %v286 = vpop.permute.xlu0 %285
        %287 = vrot.lane.b32.xlu0 %v282, 115
        %v288 = vpop.permute.xlu0 %287
        %v289 = vrot.slane %v286, 4
        %v290 = vrot.slane %v288, 4
        %vm291 = vcmask 941056
        %v292 = vsel %vm291, %v286, %v289
        %v293 = vsel %vm291, %v288, %v290
        %296 = vst [vmem:[#allocation2 + $0x20] sm:$0xf] %v292
        %297 = vst [vmem:[#allocation2 + $0x24] sm:$0xf] %v293
        %v298 = vld [vmem:[%s225] sm:$0xff]
        %v299 = vld [vmem:[%s225 + $0x8] sm:$0xff]
        %302 = vrot.lane.b32.xlu0 %v298, 114
        %v303 = vpop.permute.xlu0 %302
        %304 = vrot.lane.b32.xlu0 %v299, 114
        %v305 = vpop.permute.xlu0 %304
        %v306 = vrot.slane %v303, 4
        %v307 = vrot.slane %v305, 4
        %vm308 = vcmask 932864
        %v309 = vsel %vm308, %v303, %v306
        %v310 = vsel %vm308, %v305, %v307
        %313 = vst [vmem:[#allocation2 + $0x28] sm:$0xf] %v309
        %314 = vst [vmem:[#allocation2 + $0x2c] sm:$0xf] %v310
        %v315 = vld [vmem:[%s225] sm:$0xff]
        %v316 = vld [vmem:[%s225 + $0x8] sm:$0xff]
        %319 = vrot.lane.b32.xlu0 %v315, 104
        %v320 = vpop.permute.xlu0 %319
        %321 = vrot.lane.b32.xlu0 %v316, 104
        %v322 = vpop.permute.xlu0 %321
        %v323 = vrot.slane %v320, 4
        %v324 = vrot.slane %v322, 4
        %vm325 = vcmask 850944
        %v326 = vsel %vm325, %v320, %v323
        %v327 = vsel %vm325, %v322, %v324
        %330 = vst [vmem:[#allocation2 + $0x30] sm:$0xf] %v326
        %331 = vst [vmem:[#allocation2 + $0x34] sm:$0xf] %v327
        %v332 = vld [vmem:[%s225] sm:$0xff]
        %v333 = vld [vmem:[%s225 + $0x8] sm:$0xff]
        %336 = vrot.lane.b32.xlu0 %v332, 103
        %v337 = vpop.permute.xlu0 %336
        %338 = vrot.lane.b32.xlu0 %v333, 103
        %v339 = vpop.permute.xlu0 %338
        %v340 = vrot.slane %v337, 4
        %v341 = vrot.slane %v339, 4
        %vm342 = vcmask 842752
        %v343 = vsel %vm342, %v337, %v340
        %v344 = vsel %vm342, %v339, %v341
        %347 = vst [vmem:[#allocation2 + $0x38] sm:$0xf] %v343
        %348 = vst [vmem:[#allocation2 + $0x3c] sm:$0xf] %v344
        %v349 = vld [vmem:[%s225] sm:$0xff]
        %v350 = vld [vmem:[%s225 + $0x8] sm:$0xff]
        %353 = vrot.lane.b32.xlu0 %v349, 102
        %v354 = vpop.permute.xlu0 %353
        %355 = vrot.lane.b32.xlu0 %v350, 102
        %v356 = vpop.permute.xlu0 %355
        %v357 = vrot.slane %v354, 4
        %v358 = vrot.slane %v356, 4
        %vm359 = vcmask 834560
        %v360 = vsel %vm359, %v354, %v357
        %v361 = vsel %vm359, %v356, %v358
        %364 = vst [vmem:[#allocation2 + $0x40] sm:$0xf] %v360
        %365 = vst [vmem:[#allocation2 + $0x44] sm:$0xf] %v361
        %s366 = sadd.s32 %s26, 1
        %s367 = smul.u32 %s366, 4
        %s368 = smul.addr %s367, 4
        %s369 = scalar_lea.vmem %s193, %s368 [#allocation3]
        %v370 = vld [vmem:[%s369] sm:$0xf]
        %v371 = vld [vmem:[%s369 + $0x8] sm:$0xf]
        %372 = vst [vmem:[#allocation2 + $0x48] sm:$0xf] %v370
        %373 = vst [vmem:[#allocation2 + $0x4c] sm:$0xf] %v371
        %v374 = vld [vmem:[%s369] sm:$0xff]
        %v375 = vld [vmem:[%s369 + $0x8] sm:$0xff]
        %378 = vrot.lane.b32.xlu0 %v374, 127
        %v379 = vpop.permute.xlu0 %378
        %380 = vrot.lane.b32.xlu0 %v375, 127
        %v381 = vpop.permute.xlu0 %380
        %v382 = vrot.slane %v379, 4
        %v383 = vrot.slane %v381, 4
        %v384 = vsel %vm240, %v379, %v382
        %v385 = vsel %vm240, %v381, %v383
        %388 = vst [vmem:[#allocation2 + $0x50] sm:$0xf] %v384
        %389 = vst [vmem:[#allocation2 + $0x54] sm:$0xf] %v385
        %v390 = vld [vmem:[%s369] sm:$0xff]
        %v391 = vld [vmem:[%s369 + $0x8] sm:$0xff]
        %394 = vrot.lane.b32.xlu0 %v390, 126
        %v395 = vpop.permute.xlu0 %394
        %396 = vrot.lane.b32.xlu0 %v391, 126
        %v397 = vpop.permute.xlu0 %396
        %v398 = vrot.slane %v395, 4
        %v399 = vrot.slane %v397, 4
        %v400 = vsel %vm257, %v395, %v398
        %v401 = vsel %vm257, %v397, %v399
        %404 = vst [vmem:[#allocation2 + $0x58] sm:$0xf] %v400
        %405 = vst [vmem:[#allocation2 + $0x5c] sm:$0xf] %v401
        %v406 = vld [vmem:[%s369] sm:$0xff]
        %v407 = vld [vmem:[%s369 + $0x8] sm:$0xff]
        %410 = vrot.lane.b32.xlu0 %v406, 116
        %v411 = vpop.permute.xlu0 %410
        %412 = vrot.lane.b32.xlu0 %v407, 116
        %v413 = vpop.permute.xlu0 %412
        %v414 = vrot.slane %v411, 4
        %v415 = vrot.slane %v413, 4
        %v416 = vsel %vm274, %v411, %v414
        %v417 = vsel %vm274, %v413, %v415
        %420 = vst [vmem:[#allocation2 + $0x60] sm:$0xf] %v416
        %421 = vst [vmem:[#allocation2 + $0x64] sm:$0xf] %v417
        %v422 = vld [vmem:[%s369] sm:$0xff]
        %v423 = vld [vmem:[%s369 + $0x8] sm:$0xff]
        %426 = vrot.lane.b32.xlu0 %v422, 115
        %v427 = vpop.permute.xlu0 %426
        %428 = vrot.lane.b32.xlu0 %v423, 115
        %v429 = vpop.permute.xlu0 %428
        %v430 = vrot.slane %v427, 4
        %v431 = vrot.slane %v429, 4
        %v432 = vsel %vm291, %v427, %v430
        %v433 = vsel %vm291, %v429, %v431
        %436 = vst [vmem:[#allocation2 + $0x68] sm:$0xf] %v432
        %437 = vst [vmem:[#allocation2 + $0x6c] sm:$0xf] %v433
        %v438 = vld [vmem:[%s369] sm:$0xff]
        %v439 = vld [vmem:[%s369 + $0x8] sm:$0xff]
        %442 = vrot.lane.b32.xlu0 %v438, 114
        %v443 = vpop.permute.xlu0 %442
        %444 = vrot.lane.b32.xlu0 %v439, 114
        %v445 = vpop.permute.xlu0 %444
        %v446 = vrot.slane %v443, 4
        %v447 = vrot.slane %v445, 4
        %v448 = vsel %vm308, %v443, %v446
        %v449 = vsel %vm308, %v445, %v447
        %452 = vst [vmem:[#allocation2 + $0x70] sm:$0xf] %v448
        %453 = vst [vmem:[#allocation2 + $0x74] sm:$0xf] %v449
        %v454 = vld [vmem:[%s369] sm:$0xff]
        %v455 = vld [vmem:[%s369 + $0x8] sm:$0xff]
        %458 = vrot.lane.b32.xlu0 %v454, 104
        %v459 = vpop.permute.xlu0 %458
        %460 = vrot.lane.b32.xlu0 %v455, 104
        %v461 = vpop.permute.xlu0 %460
        %v462 = vrot.slane %v459, 4
        %v463 = vrot.slane %v461, 4
        %v464 = vsel %vm325, %v459, %v462
        %v465 = vsel %vm325, %v461, %v463
        %468 = vst [vmem:[#allocation2 + $0x78] sm:$0xf] %v464
        %469 = vst [vmem:[#allocation2 + $0x7c] sm:$0xf] %v465
        %v470 = vld [vmem:[%s369] sm:$0xff]
        %v471 = vld [vmem:[%s369 + $0x8] sm:$0xff]
        %474 = vrot.lane.b32.xlu0 %v470, 103
        %v475 = vpop.permute.xlu0 %474
        %476 = vrot.lane.b32.xlu0 %v471, 103
        %v477 = vpop.permute.xlu0 %476
        %v478 = vrot.slane %v475, 4
        %v479 = vrot.slane %v477, 4
        %v480 = vsel %vm342, %v475, %v478
        %v481 = vsel %vm342, %v477, %v479
        %484 = vst [vmem:[#allocation2 + $0x80] sm:$0xf] %v480
        %485 = vst [vmem:[#allocation2 + $0x84] sm:$0xf] %v481
        %v486 = vld [vmem:[%s369] sm:$0xff]
        %v487 = vld [vmem:[%s369 + $0x8] sm:$0xff]
        %490 = vrot.lane.b32.xlu0 %v486, 102
        %v491 = vpop.permute.xlu0 %490
        %492 = vrot.lane.b32.xlu0 %v487, 102
        %v493 = vpop.permute.xlu0 %492
        %v494 = vrot.slane %v491, 4
        %v495 = vrot.slane %v493, 4
        %v496 = vsel %vm359, %v491, %v494
        %v497 = vsel %vm359, %v493, %v495
        %500 = vst [vmem:[#allocation2 + $0x88] sm:$0xf] %v496
        %501 = vst [vmem:[#allocation2 + $0x8c] sm:$0xf] %v497
        %s502 = sadd.s32 %s26, 2
        %s503 = smul.u32 %s502, 4
        %s504 = smul.addr %s503, 4
        %s505 = scalar_lea.vmem %s193, %s504 [#allocation3]
        %v506 = vld [vmem:[%s505] sm:$0xf]
        %v507 = vld [vmem:[%s505 + $0x8] sm:$0xf]
        %508 = vst [vmem:[#allocation2 + $0x90] sm:$0xf] %v506
        %509 = vst [vmem:[#allocation2 + $0x94] sm:$0xf] %v507
        %v510 = vld [vmem:[%s505] sm:$0xff]
        %v511 = vld [vmem:[%s505 + $0x8] sm:$0xff]
        %514 = vrot.lane.b32.xlu0 %v510, 127
        %v515 = vpop.permute.xlu0 %514
        %516 = vrot.lane.b32.xlu0 %v511, 127
        %v517 = vpop.permute.xlu0 %516
        %v518 = vrot.slane %v515, 4
        %v519 = vrot.slane %v517, 4
        %v520 = vsel %vm240, %v515, %v518
        %v521 = vsel %vm240, %v517, %v519
        %524 = vst [vmem:[#allocation2 + $0x98] sm:$0xf] %v520
        %525 = vst [vmem:[#allocation2 + $0x9c] sm:$0xf] %v521
        %v526 = vld [vmem:[%s505] sm:$0xff]
        %v527 = vld [vmem:[%s505 + $0x8] sm:$0xff]
        %530 = vrot.lane.b32.xlu0 %v526, 126
        %v531 = vpop.permute.xlu0 %530
        %532 = vrot.lane.b32.xlu0 %v527, 126
        %v533 = vpop.permute.xlu0 %532
        %v534 = vrot.slane %v531, 4
        %v535 = vrot.slane %v533, 4
        %v536 = vsel %vm257, %v531, %v534
        %v537 = vsel %vm257, %v533, %v535
        %540 = vst [vmem:[#allocation2 + $0xa0] sm:$0xf] %v536
        %541 = vst [vmem:[#allocation2 + $0xa4] sm:$0xf] %v537
        %v542 = vld [vmem:[%s505] sm:$0xff]
        %v543 = vld [vmem:[%s505 + $0x8] sm:$0xff]
        %546 = vrot.lane.b32.xlu0 %v542, 116
        %v547 = vpop.permute.xlu0 %546
        %548 = vrot.lane.b32.xlu0 %v543, 116
        %v549 = vpop.permute.xlu0 %548
        %v550 = vrot.slane %v547, 4
        %v551 = vrot.slane %v549, 4
        %v552 = vsel %vm274, %v547, %v550
        %v553 = vsel %vm274, %v549, %v551
        %556 = vst [vmem:[#allocation2 + $0xa8] sm:$0xf] %v552
        %557 = vst [vmem:[#allocation2 + $0xac] sm:$0xf] %v553
        %v558 = vld [vmem:[%s505] sm:$0xff]
        %v559 = vld [vmem:[%s505 + $0x8] sm:$0xff]
        %562 = vrot.lane.b32.xlu0 %v558, 115
        %v563 = vpop.permute.xlu0 %562
        %564 = vrot.lane.b32.xlu0 %v559, 115
        %v565 = vpop.permute.xlu0 %564
        %v566 = vrot.slane %v563, 4
        %v567 = vrot.slane %v565, 4
        %v568 = vsel %vm291, %v563, %v566
        %v569 = vsel %vm291, %v565, %v567
        %572 = vst [vmem:[#allocation2 + $0xb0] sm:$0xf] %v568
        %573 = vst [vmem:[#allocation2 + $0xb4] sm:$0xf] %v569
        %v574 = vld [vmem:[%s505] sm:$0xff]
        %v575 = vld [vmem:[%s505 + $0x8] sm:$0xff]
        %578 = vrot.lane.b32.xlu0 %v574, 114
        %v579 = vpop.permute.xlu0 %578
        %580 = vrot.lane.b32.xlu0 %v575, 114
        %v581 = vpop.permute.xlu0 %580
        %v582 = vrot.slane %v579, 4
        %v583 = vrot.slane %v581, 4
        %v584 = vsel %vm308, %v579, %v582
        %v585 = vsel %vm308, %v581, %v583
        %588 = vst [vmem:[#allocation2 + $0xb8] sm:$0xf] %v584
        %589 = vst [vmem:[#allocation2 + $0xbc] sm:$0xf] %v585
        %v590 = vld [vmem:[%s505] sm:$0xff]
        %v591 = vld [vmem:[%s505 + $0x8] sm:$0xff]
        %594 = vrot.lane.b32.xlu0 %v590, 104
        %v595 = vpop.permute.xlu0 %594
        %596 = vrot.lane.b32.xlu0 %v591, 104
        %v597 = vpop.permute.xlu0 %596
        %v598 = vrot.slane %v595, 4
        %v599 = vrot.slane %v597, 4
        %v600 = vsel %vm325, %v595, %v598
        %v601 = vsel %vm325, %v597, %v599
        %604 = vst [vmem:[#allocation2 + $0xc0] sm:$0xf] %v600
        %605 = vst [vmem:[#allocation2 + $0xc4] sm:$0xf] %v601
        %v606 = vld [vmem:[%s505] sm:$0xff]
        %v607 = vld [vmem:[%s505 + $0x8] sm:$0xff]
        %610 = vrot.lane.b32.xlu0 %v606, 103
        %v611 = vpop.permute.xlu0 %610
        %612 = vrot.lane.b32.xlu0 %v607, 103
        %v613 = vpop.permute.xlu0 %612
        %v614 = vrot.slane %v611, 4
        %v615 = vrot.slane %v613, 4
        %v616 = vsel %vm342, %v611, %v614
        %v617 = vsel %vm342, %v613, %v615
        %620 = vst [vmem:[#allocation2 + $0xc8] sm:$0xf] %v616
        %621 = vst [vmem:[#allocation2 + $0xcc] sm:$0xf] %v617
        %v622 = vld [vmem:[%s505] sm:$0xff]
        %v623 = vld [vmem:[%s505 + $0x8] sm:$0xff]
        %626 = vrot.lane.b32.xlu0 %v622, 102
        %v627 = vpop.permute.xlu0 %626
        %628 = vrot.lane.b32.xlu0 %v623, 102
        %v629 = vpop.permute.xlu0 %628
        %v630 = vrot.slane %v627, 4
        %v631 = vrot.slane %v629, 4
        %v632 = vsel %vm359, %v627, %v630
        %v633 = vsel %vm359, %v629, %v631
        %636 = vst [vmem:[#allocation2 + $0xd0] sm:$0xf] %v632
        %637 = vst [vmem:[#allocation2 + $0xd4] sm:$0xf] %v633
        %v638 = vld [vmem:[#allocation6] sm:$0xff]
        %v639 = vld [vmem:[#allocation6 + $0x8] sm:$0xff]
        %v640 = vld [vmem:[#allocation6 + $0x10] sm:$0xff]
        %v641 = vld [vmem:[#allocation6 + $0x18] sm:$0xff]
        %v642 = vld [vmem:[#allocation2] sm:$0xf]
        %v643 = vld [vmem:[#allocation2 + $0x4] sm:$0xf]
        %v644 = vld [vmem:[#allocation2 + $0x8] sm:$0xf]
        %v645 = vld [vmem:[#allocation2 + $0xc] sm:$0xf]
        %v646 = vld [vmem:[#allocation2 + $0x10] sm:$0xf]
        %v647 = vld [vmem:[#allocation2 + $0x14] sm:$0xf]
        %v648 = vld [vmem:[#allocation2 + $0x18] sm:$0xf]
        %v649 = vld [vmem:[#allocation2 + $0x1c] sm:$0xf]
        %v650 = vld [vmem:[#allocation2 + $0x20] sm:$0xf]
        %v651 = vld [vmem:[#allocation2 + $0x24] sm:$0xf]
        %v652 = vld [vmem:[#allocation2 + $0x28] sm:$0xf]
        %v653 = vld [vmem:[#allocation2 + $0x2c] sm:$0xf]
        %v654 = vld [vmem:[#allocation2 + $0x30] sm:$0xf]
        %v655 = vld [vmem:[#allocation2 + $0x34] sm:$0xf]
        %v656 = vld [vmem:[#allocation2 + $0x38] sm:$0xf]
        %v657 = vld [vmem:[#allocation2 + $0x3c] sm:$0xf]
        %v658 = vld [vmem:[#allocation2 + $0x40] sm:$0xf]
        %v659 = vld [vmem:[#allocation2 + $0x44] sm:$0xf]
        %v660 = vld [vmem:[#allocation2 + $0x48] sm:$0xf]
        %v661 = vld [vmem:[#allocation2 + $0x4c] sm:$0xf]
        %v662 = vld [vmem:[#allocation2 + $0x50] sm:$0xf]
        %v663 = vld [vmem:[#allocation2 + $0x54] sm:$0xf]
        %v664 = vld [vmem:[#allocation2 + $0x58] sm:$0xf]
        %v665 = vld [vmem:[#allocation2 + $0x5c] sm:$0xf]
        %v666 = vld [vmem:[#allocation2 + $0x60] sm:$0xf]
        %v667 = vld [vmem:[#allocation2 + $0x64] sm:$0xf]
        %v668 = vld [vmem:[#allocation2 + $0x68] sm:$0xf]
        %v669 = vld [vmem:[#allocation2 + $0x6c] sm:$0xf]
        %v670 = vld [vmem:[#allocation2 + $0x70] sm:$0xf]
        %v671 = vld [vmem:[#allocation2 + $0x74] sm:$0xf]
        %v672 = vld [vmem:[#allocation2 + $0x78] sm:$0xf]
        %v673 = vld [vmem:[#allocation2 + $0x7c] sm:$0xf]
        %v674 = vld [vmem:[#allocation2 + $0x80] sm:$0xf]
        %v675 = vld [vmem:[#allocation2 + $0x84] sm:$0xf]
        %v676 = vld [vmem:[#allocation2 + $0x88] sm:$0xf]
        %v677 = vld [vmem:[#allocation2 + $0x8c] sm:$0xf]
        %v678 = vld [vmem:[#allocation2 + $0x90] sm:$0xf]
        %v679 = vld [vmem:[#allocation2 + $0x94] sm:$0xf]
        %v680 = vld [vmem:[#allocation2 + $0x98] sm:$0xf]
        %v681 = vld [vmem:[#allocation2 + $0x9c] sm:$0xf]
        %v682 = vld [vmem:[#allocation2 + $0xa0] sm:$0xf]
        %v683 = vld [vmem:[#allocation2 + $0xa4] sm:$0xf]
        %v684 = vld [vmem:[#allocation2 + $0xa8] sm:$0xf]
        %v685 = vld [vmem:[#allocation2 + $0xac] sm:$0xf]
        %v686 = vld [vmem:[#allocation2 + $0xb0] sm:$0xf]
        %v687 = vld [vmem:[#allocation2 + $0xb4] sm:$0xf]
        %v688 = vld [vmem:[#allocation2 + $0xb8] sm:$0xf]
        %v689 = vld [vmem:[#allocation2 + $0xbc] sm:$0xf]
        %v690 = vld [vmem:[#allocation2 + $0xc0] sm:$0xf]
        %v691 = vld [vmem:[#allocation2 + $0xc4] sm:$0xf]
        %v692 = vld [vmem:[#allocation2 + $0xc8] sm:$0xf]
        %v693 = vld [vmem:[#allocation2 + $0xcc] sm:$0xf]
        %v694 = vld [vmem:[#allocation2 + $0xd0] sm:$0xf]
        %v695 = vld [vmem:[#allocation2 + $0xd4] sm:$0xf]
        %v696 = vld [vmem:[%s2] sm:$0xff]
        %v697 = vld [vmem:[%s2 + $0x8] sm:$0xff]
        %699 = vset.pattern.permute.xlu0 0
        %700 = vperm.xlu0 %699, %v696
        %v701 = vpop.permute.xlu0 %700
        %704 = vset.pattern.permute.xlu0 0
        %705 = vperm.xlu0 %704, %v697
        %v706 = vpop.permute.xlu0 %705
        %v712 = vunpack.c.l.b16 %v638
        %v713 = vunpack.c.h.b16 %v638
        %v714 = vunpack.c.l.b16 %v639
        %v715 = vunpack.c.h.b16 %v639
        %v716 = vunpack.c.l.b16 %v640
        %v717 = vunpack.c.h.b16 %v640
        %v718 = vunpack.c.l.b16 %v641
        %v719 = vunpack.c.h.b16 %v641
        %v720 = vpack.c.b16 %v716, %v712
        %v721 = vpack.c.b16 %v717, %v713
        %v722 = vpack.c.b16 %v718, %v714
        %v723 = vpack.c.b16 %v719, %v715
        %v781 = vunpack.c.l.b16 %v642
        %v782 = vunpack.c.l.b16 %v643
        %v783 = vunpack.c.l.b16 %v644
        %v784 = vunpack.c.l.b16 %v645
        %v785 = vunpack.c.l.b16 %v646
        %v786 = vunpack.c.l.b16 %v647
        %v787 = vunpack.c.l.b16 %v648
        %v788 = vunpack.c.l.b16 %v649
        %v789 = vunpack.c.l.b16 %v650
        %v790 = vunpack.c.l.b16 %v651
        %v791 = vunpack.c.l.b16 %v652
        %v792 = vunpack.c.l.b16 %v653
        %v793 = vunpack.c.l.b16 %v654
        %v794 = vunpack.c.l.b16 %v655
        %v795 = vunpack.c.l.b16 %v656
        %v796 = vunpack.c.l.b16 %v657
        %v797 = vunpack.c.l.b16 %v658
        %v798 = vunpack.c.l.b16 %v659
        %v799 = vunpack.c.l.b16 %v660
        %v800 = vunpack.c.l.b16 %v661
        %v801 = vunpack.c.l.b16 %v662
        %v802 = vunpack.c.l.b16 %v663
        %v803 = vunpack.c.l.b16 %v664
        %v804 = vunpack.c.l.b16 %v665
        %v805 = vunpack.c.l.b16 %v666
        %v806 = vunpack.c.l.b16 %v667
        %v807 = vunpack.c.l.b16 %v668
        %v808 = vunpack.c.l.b16 %v669
        %v809 = vunpack.c.l.b16 %v670
        %v810 = vunpack.c.l.b16 %v671
        %v811 = vunpack.c.l.b16 %v672
        %v812 = vunpack.c.l.b16 %v673
        %v813 = vunpack.c.l.b16 %v674
        %v814 = vunpack.c.l.b16 %v675
        %v815 = vunpack.c.l.b16 %v676
        %v816 = vunpack.c.l.b16 %v677
        %v817 = vunpack.c.l.b16 %v678
        %v818 = vunpack.c.l.b16 %v679
        %v819 = vunpack.c.l.b16 %v680
        %v820 = vunpack.c.l.b16 %v681
        %v821 = vunpack.c.l.b16 %v682
        %v822 = vunpack.c.l.b16 %v683
        %v823 = vunpack.c.l.b16 %v684
        %v824 = vunpack.c.l.b16 %v685
        %v825 = vunpack.c.l.b16 %v686
        %v826 = vunpack.c.l.b16 %v687
        %v827 = vunpack.c.l.b16 %v688
        %v828 = vunpack.c.l.b16 %v689
        %v829 = vunpack.c.l.b16 %v690
        %v830 = vunpack.c.l.b16 %v691
        %v831 = vunpack.c.l.b16 %v692
        %v832 = vunpack.c.l.b16 %v693
        %v833 = vunpack.c.l.b16 %v694
        %v834 = vunpack.c.l.b16 %v695
        %v835 = vpack.c.b16 %v782, %v781
        %v836 = vpack.c.b16 %v784, %v783
        %v837 = vpack.c.b16 %v786, %v785
        %v838 = vpack.c.b16 %v788, %v787
        %v839 = vpack.c.b16 %v790, %v789
        %v840 = vpack.c.b16 %v792, %v791
        %v841 = vpack.c.b16 %v794, %v793
        %v842 = vpack.c.b16 %v796, %v795
        %v843 = vpack.c.b16 %v798, %v797
        %v844 = vpack.c.b16 %v800, %v799
        %v845 = vpack.c.b16 %v802, %v801
        %v846 = vpack.c.b16 %v804, %v803
        %v847 = vpack.c.b16 %v806, %v805
        %v848 = vpack.c.b16 %v808, %v807
        %v849 = vpack.c.b16 %v810, %v809
        %v850 = vpack.c.b16 %v812, %v811
        %v851 = vpack.c.b16 %v814, %v813
        %v852 = vpack.c.b16 %v816, %v815
        %v853 = vpack.c.b16 %v818, %v817
        %v854 = vpack.c.b16 %v820, %v819
        %v855 = vpack.c.b16 %v822, %v821
        %v856 = vpack.c.b16 %v824, %v823
        %v857 = vpack.c.b16 %v826, %v825
        %v858 = vpack.c.b16 %v828, %v827
        %v859 = vpack.c.b16 %v830, %v829
        %v860 = vpack.c.b16 %v832, %v831
        %v861 = vpack.c.b16 %v834, %v833
        %vm889 = vcmask 392192
        %v891 = vsel %vm889, %v723, 0
        %893 = vmatpush.bf16.msra.mxu0 %v842
        %894 = vmatpush.bf16.msra.mxu0 %v841
        %895 = vmatpush.bf16.msra.mxu0 %v840
        %896 = vmatpush.bf16.msra.mxu0 %v839
        %897 = vmatpush.bf16.msra.mxu0 %v838
        %898 = vmatpush.bf16.msra.mxu0 %v837
        %899 = vmatpush.bf16.msra.mxu0 %v836
        %900 = vmatpush.bf16.msra.mxu0 %v835
        %901 = vmatmul.bf16.gmra.mxu0 %v720
        %v902 = vpop.f32.mrf.mxu0
        %v903 = vadd.f32 %v701, %v902
        %v904 = vpop.f32.mrf.mxu0
        %v905 = vadd.f32 %v706, %v904
        %906 = vdwg.mxu0
        %907 = vmatpush.bf16.msra.mxu0 %v850
        %908 = vmatpush.bf16.msra.mxu0 %v849
        %909 = vmatpush.bf16.msra.mxu0 %v848
        %910 = vmatpush.bf16.msra.mxu0 %v847
        %911 = vmatpush.bf16.msra.mxu0 %v846
        %912 = vmatpush.bf16.msra.mxu0 %v845
        %913 = vmatpush.bf16.msra.mxu0 %v844
        %914 = vmatpush.bf16.msra.mxu0 %v843
        %915 = vmatmul.bf16.gmra.mxu0 %v721
        %v916 = vpop.f32.mrf.mxu0
        %v917 = vadd.f32 %v903, %v916
        %v918 = vpop.f32.mrf.mxu0
        %v919 = vadd.f32 %v905, %v918
        %920 = vdwg.mxu0
        %921 = vmatpush.bf16.msra.mxu0 %v858
        %922 = vmatpush.bf16.msra.mxu0 %v857
        %923 = vmatpush.bf16.msra.mxu0 %v856
        %924 = vmatpush.bf16.msra.mxu0 %v855
        %925 = vmatpush.bf16.msra.mxu0 %v854
        %926 = vmatpush.bf16.msra.mxu0 %v853
        %927 = vmatpush.bf16.msra.mxu0 %v852
        %928 = vmatpush.bf16.msra.mxu0 %v851
        %929 = vmatmul.bf16.gmra.mxu0 %v722
        %v930 = vpop.f32.mrf.mxu0
        %v931 = vadd.f32 %v917, %v930
        %v932 = vpop.f32.mrf.mxu0
        %v933 = vadd.f32 %v919, %v932
        %934 = vdwg.mxu0
        %935 = vmatpush.bf16.msra.mxu0 0
        %936 = vmatpush.bf16.msra.mxu0 0
        %937 = vmatpush.bf16.msra.mxu0 0
        %938 = vmatpush.bf16.msra.mxu0 0
        %939 = vmatpush.bf16.msra.mxu0 0
        %940 = vmatpush.bf16.msra.mxu0 %v861
        %941 = vmatpush.bf16.msra.mxu0 %v860
        %942 = vmatpush.bf16.msra.mxu0 %v859
        %943 = vmatmul.bf16.gmra.mxu0 %v891
        %v944 = vpop.f32.mrf.mxu0
        %v945 = vadd.f32 %v931, %v944
        %v946 = vpop.f32.mrf.mxu0
        %v947 = vadd.f32 %v933, %v946
        %948 = vdwg.mxu0
        %v949 = vmax.f32 %v945, 0.0
        %v950 = vmax.f32 %v947, 0.0
        %951 = vst [vmem:[%s221] sm:$0xff] %v949
        %952 = vst [vmem:[%s221 + $0x8] sm:$0xff] %v950
        %s953 = sand.u32 %s111, 1
        %s954 = scalar_lea.sflag [#allocation5], %s953
        %s955 = sand.u32 %s111, 1
        %s956 = smul.addr %s955, 16
        %s957 = scalar_lea.vmem [#allocation8], %s956
        // Predicated region
        $region41: #{tpu_custom_call.1} parent=31 // pred_check
          %p958 = pneg %p121
        $region42: #{tpu_custom_call.1} parent=31 // pred_check_branch
          %960 = sbr.rel (%p958) target = $region44
        $region43: #{tpu_custom_call.1} parent=31 // pred_region
          %962 = vsyncadd %s954, 0
          %s963 = smul.addr %s26, 2
          %s964 = smul.addr %s25, 12
          %s965 = sadd.s32 %s963, %s964
          %s966 = smul.addr %s965, 8
          %s967 = scalar_lea.hbm %s3, %s966
          %s968 = sshll.u32 %s957, 4
          %s969 = int_to_ptr.vmem [resolvable:$true] %s968
          %s970 = sshll.u32 %s967, 4
          %s971 = int_to_ptr.hbm [resolvable:$true] %s970
          %976 = dma.vmem_to_hbm [thread:$0]  %s969, 256, %s971, %s954, 128, 128, 8
        $region44: #{tpu_custom_call.1} parent=31 // pred_fallthru
          _
      $region32: #{tpu_custom_call.1} parent=5 // pred_fallthru
        _
      %p977 = scmp.le.s32.totalorder 2, %s16
      // Predicated region
      $region45: #{tpu_custom_call.1} parent=5 // pred_check
        %p978 = pneg %p977
      $region46: #{tpu_custom_call.1} parent=5 // pred_check_branch
        %980 = sbr.rel (%p978) target = $region48
      $region47: #{tpu_custom_call.1} parent=5 // pred_region
        %s981 = ssub.s32 %s16, 2
        // Predicated region
        $region49: #{tpu_custom_call.1} parent=47 // pred_check
          %p982 = pneg %p127
        $region50: #{tpu_custom_call.1} parent=47 // pred_check_branch
          %984 = sbr.rel (%p982) target = $region52
        $region51: #{tpu_custom_call.1} parent=47 // pred_region
          %s985 = sand.u32 %s112, 1
          %s986 = scalar_lea.sflag [#allocation5], %s985
          %s987 = sand.u32 %s112, 1
          %s988 = smul.addr %s987, 16
          %s989 = scalar_lea.vmem [#allocation8], %s988
          %991 = dma.done %s986, 256
        $region52: #{tpu_custom_call.1} parent=47 // pred_fallthru
          _
      $region48: #{tpu_custom_call.1} parent=5 // pred_fallthru
        _
    $region6: #{tpu_custom_call.1} parent=1 // loop_footer
      %s20 = sadd.s32 1, %s16
    $region7: #{tpu_custom_call.1} parent=1 // loop_footer_branch
      %15 = sbr.rel target = $region3
    $region8: #{tpu_custom_call.1} parent=1 // loop_exit
      _
    %992 = vsyncpa [#allocation4], 1
    %s993 = scalar_lea.sflag [#allocation4], 1
    %994 = vsyncpa %s993, 1
    %995 = vsyncpa [#allocation7], 1
    %996 = vsyncpa [#allocation5], 1
    %s997 = scalar_lea.sflag [#allocation5], 1
    %998 = vsyncpa %s997, 1

</llo_original>
